<compile_context>
chip_gen: v5e
topology: v5e:2x2
jax: 0.10.0
libtpu: 0.0.40
codegen_flags: <defaults>
</compile_context>

<pallas_src>
import numpy as np

import jax
import jax.numpy as jnp
from jax.experimental import pallas as pl
from jax.experimental.pallas import tpu as pltpu

LANE = 128


def _lane_swap_exact(x, perm_bf16):
    """Permute lanes l -> l ^ 2 of a float32 (rows, 128) tile, exactly.

    Uses the idle MXU: x is split into three bf16 limbs so each bf16 matmul
    against the 0/1 permutation matrix is exact (every output element is a
    single product by 1.0 accumulated in f32)."""
    x0 = x.astype(jnp.bfloat16)
    r1 = x - x0.astype(jnp.float32)
    x1 = r1.astype(jnp.bfloat16)
    x2 = (r1 - x1.astype(jnp.float32)).astype(jnp.bfloat16)
    out = jnp.dot(x0, perm_bf16, preferred_element_type=jnp.float32)
    out = out + jnp.dot(x1, perm_bf16, preferred_element_type=jnp.float32)
    out = out + jnp.dot(x2, perm_bf16, preferred_element_type=jnp.float32)
    return out


def bbox_transform_kernel(consts_ref, perm_ref, boxes_ref, deltas_ref, out_ref):
    # boxes_ref / deltas_ref / out_ref: (tile_rows, 128) f32 blocks of the flat
    # (B*N*4,) tensors; lanes repeat [x1,y1,x2,y2] / [dx,dy,dw,dh].
    bx = boxes_ref[...]
    dl = deltas_ref[...]

    mean_pat = consts_ref[0:1, :]          # mean[c] tiled along lanes
    std_pat = consts_ref[1:2, :]           # std[c]  tiled along lanes
    sgn = consts_ref[2:3, :]               # [+1, +1, -1, -1] tiled
    mask01 = consts_ref[3:4, :] > 0.5      # True on the x1/y1-type lanes
    perm = perm_ref[...]                   # (128, 128) bf16: lane l <- lane l^2

    sb = _lane_swap_exact(bx, perm)        # [x2, y2, x1, y1]
    w_all = sgn * (sb - bx)                # [w,  h,  w,  h ]
    c_all = 0.5 * (sb + bx)                # [cx, cy, cx, cy]
    dsc = dl * std_pat + mean_pat          # scaled deltas [dx, dy, dw, dh]
    p_all = c_all + dsc * w_all            # lanes 0,1 -> pred_ctr_{x,y}
    e_all = jnp.exp(dsc) * w_all           # lanes 2,3 -> pred_{w,h}

    u = jnp.where(mask01, p_all, 0.0)            # [pcx, pcy, 0,      0     ]
    v = jnp.where(mask01, 0.0, 0.5 * e_all)      # [0,   0,   0.5*pw, 0.5*ph]
    # out lanes 0,1 = pcx - 0.5*pw ; lanes 2,3 = pcx + 0.5*pw  (same for y).
    out_ref[...] = (u + v) + _lane_swap_exact(u - v, perm)


def bbox_transform(boxes, deltas, mean=None, std=None, *, tile_rows=2048):
    """boxes, deltas: (B, N, 4) float32 -> predicted boxes (B, N, 4) float32."""
    if mean is None:
        mean = jnp.array([0.0, 0.0, 0.0, 0.0], dtype=jnp.float32)
    if std is None:
        std = jnp.array([0.1, 0.1, 0.2, 0.2], dtype=jnp.float32)
    mean = jnp.asarray(mean, jnp.float32).reshape(4)
    std = jnp.asarray(std, jnp.float32).reshape(4)

    B, N, C = boxes.shape
    assert C == 4

    total = B * N * 4
    rows = -(-total // LANE)
    if rows <= tile_rows:
        padded_rows = -(-rows // 8) * 8        # single block covering everything
        tr = padded_rows
    else:
        tr = max(8, (tile_rows // 8) * 8)
        padded_rows = -(-rows // tr) * tr
    grid_rows = padded_rows // tr
    padded_total = padded_rows * LANE

    b_flat = boxes.astype(jnp.float32).reshape(-1)
    d_flat = deltas.astype(jnp.float32).reshape(-1)
    if padded_total != total:
        # TODO(synk): inputs whose flat size already tiles evenly skip this pad
        # (the pad is one extra HBM pass; aligned anchor counts avoid it).
        pad = padded_total - total
        b_flat = jnp.pad(b_flat, (0, pad))
        d_flat = jnp.pad(d_flat, (0, pad))
    b2 = b_flat.reshape(padded_rows, LANE)     # free bitcast reshape when no pad
    d2 = d_flat.reshape(padded_rows, LANE)

    reps = LANE // 4
    consts = jnp.stack(
        [
            jnp.tile(mean, reps),
            jnp.tile(std, reps),
            jnp.tile(jnp.array([1.0, 1.0, -1.0, -1.0], jnp.float32), reps),
            jnp.tile(jnp.array([1.0, 1.0, 0.0, 0.0], jnp.float32), reps),
        ],
        axis=0,
    )                                           # (4, 128) f32

    idx = np.arange(LANE)
    perm_np = np.zeros((LANE, LANE), dtype=np.float32)
    perm_np[idx, idx ^ 2] = 1.0                 # lane l <- lane l ^ 2
    perm = jnp.asarray(perm_np, dtype=jnp.bfloat16)

    out2 = pl.pallas_call(
        bbox_transform_kernel,
        out_shape=jax.ShapeDtypeStruct((padded_rows, LANE), jnp.float32),
        grid=(grid_rows,),
        in_specs=[
            pl.BlockSpec((4, LANE), lambda i: (0, 0)),       # consts
            pl.BlockSpec((LANE, LANE), lambda i: (0, 0)),    # permutation matrix
            pl.BlockSpec((tr, LANE), lambda i: (i, 0)),      # boxes (flat view)
            pl.BlockSpec((tr, LANE), lambda i: (i, 0)),      # deltas (flat view)
        ],
        out_specs=pl.BlockSpec((tr, LANE), lambda i: (i, 0)),
        compiler_params=pltpu.CompilerParams(
            dimension_semantics=("parallel",)),
    )(consts, perm, b2, d2)

    out_flat = out2.reshape(-1)
    if padded_total != total:
        out_flat = out_flat[:total]
    return out_flat.reshape(B, N, 4)


def bbox_transform_ref(boxes, deltas, mean, std):
    """Pure-JAX reference mirroring the PyTorch forward."""
    widths = boxes[:, :, 2] - boxes[:, :, 0]
    heights = boxes[:, :, 3] - boxes[:, :, 1]
    ctr_x = boxes[:, :, 0] + 0.5 * widths
    ctr_y = boxes[:, :, 1] + 0.5 * heights
    dx = deltas[:, :, 0] * std[0] + mean[0]
    dy = deltas[:, :, 1] * std[1] + mean[1]
    dw = deltas[:, :, 2] * std[2] + mean[2]
    dh = deltas[:, :, 3] * std[3] + mean[3]
    pred_ctr_x = ctr_x + dx * widths
    pred_ctr_y = ctr_y + dy * heights
    pred_w = jnp.exp(dw) * widths
    pred_h = jnp.exp(dh) * heights
    return jnp.stack(
        [pred_ctr_x - 0.5 * pred_w,
         pred_ctr_y - 0.5 * pred_h,
         pred_ctr_x + 0.5 * pred_w,
         pred_ctr_y + 0.5 * pred_h],
        axis=2)


if __name__ == "__main__":
    key = jax.random.PRNGKey(0)
    k1, k2, k3 = jax.random.split(key, 3)

    B, N = 2, 4096  # batch, num anchors (small but enough to tile)

    # Valid boxes: x1 < x2, y1 < y2.
    xy = jax.random.uniform(k1, (B, N, 2), dtype=jnp.float32) * 50.0
    wh = jax.random.uniform(k2, (B, N, 2), dtype=jnp.float32) * 20.0 + 1.0
    boxes = jnp.concatenate([xy, xy + wh], axis=2)                 # (B, N, 4)
    deltas = jax.random.normal(k3, (B, N, 4), dtype=jnp.float32)   # (B, N, 4)

    mean = jnp.array([0.0, 0.0, 0.0, 0.0], dtype=jnp.float32)
    std = jnp.array([0.1, 0.1, 0.2, 0.2], dtype=jnp.float32)

    # Case 1: multi-step grid (small tile so several pipeline steps run).
    out = jax.jit(lambda b, d: bbox_transform(b, d, mean, std, tile_rows=64))(
        boxes, deltas)
    out = jax.block_until_ready(out)
    ref = bbox_transform_ref(boxes, deltas, mean, std)
    assert out.shape == (B, N, 4)
    assert jnp.allclose(out, ref, atol=2e-4, rtol=1e-5), "mismatch vs reference"

    # Case 2: odd anchor count exercising the padding / single-block path.
    N2 = 1010
    boxes_s, deltas_s = boxes[:, :N2, :], deltas[:, :N2, :]
    out_s = jax.jit(lambda b, d: bbox_transform(b, d, mean, std))(
        boxes_s, deltas_s)
    out_s = jax.block_until_ready(out_s)
    ref_s = bbox_transform_ref(boxes_s, deltas_s, mean, std)
    assert out_s.shape == (B, N2, 4)
    assert jnp.allclose(out_s, ref_s, atol=2e-4, rtol=1e-5), "mismatch (padded)"

    print("KERNEL_OK")
</pallas_src>

<mosaic_0001>
module attributes {stable_mosaic.version = 11 : i64} {
  func.func @bbox_transform_kernel(%arg0: i32, %arg1: memref<4x128xf32, #tpu.memory_space<vmem>>, %arg2: memref<128x128xbf16, #tpu.memory_space<vmem>>, %arg3: memref<64x128xf32, #tpu.memory_space<vmem>>, %arg4: memref<64x128xf32, #tpu.memory_space<vmem>>, %arg5: memref<64x128xf32, #tpu.memory_space<vmem>>) attributes {dimension_semantics = [#tpu.dimension_semantics<parallel>], iteration_bounds = array<i64: 4>, scalar_prefetch = 0 : i64, scratch_operands = 0 : i64, tpu.core_type = #tpu.core_type<tc>, window_params = [{pipeline_mode = #tpu.pipeline_mode<synchronous>, transform_indices = @transform_0, window_bounds = array<i64: 4, 128>}, {pipeline_mode = #tpu.pipeline_mode<synchronous>, transform_indices = @transform_1, window_bounds = array<i64: 128, 128>}, {transform_indices = @transform_2, window_bounds = array<i64: 64, 128>}, {transform_indices = @transform_3, window_bounds = array<i64: 64, 128>}, {transform_indices = @transform_4, window_bounds = array<i64: 64, 128>}]} {
    %c0 = arith.constant 0 : index
    %c0_0 = arith.constant 0 : index
    %0 = vector.load %arg3[%c0, %c0_0] : memref<64x128xf32, #tpu.memory_space<vmem>>, vector<64x128xf32>
    %c0_1 = arith.constant 0 : index
    %c0_2 = arith.constant 0 : index
    %1 = vector.load %arg4[%c0_1, %c0_2] : memref<64x128xf32, #tpu.memory_space<vmem>>, vector<64x128xf32>
    %c0_3 = arith.constant 0 : index
    %c0_4 = arith.constant 0 : index
    %2 = vector.load %arg1[%c0_3, %c0_4] : memref<4x128xf32, #tpu.memory_space<vmem>>, vector<1x128xf32>
    %c1 = arith.constant 1 : index
    %c0_5 = arith.constant 0 : index
    %3 = vector.load %arg1[%c1, %c0_5] : memref<4x128xf32, #tpu.memory_space<vmem>>, vector<1x128xf32>
    %c2 = arith.constant 2 : index
    %c0_6 = arith.constant 0 : index
    %4 = vector.load %arg1[%c2, %c0_6] : memref<4x128xf32, #tpu.memory_space<vmem>>, vector<1x128xf32>
    %c3 = arith.constant 3 : index
    %c0_7 = arith.constant 0 : index
    %5 = vector.load %arg1[%c3, %c0_7] : memref<4x128xf32, #tpu.memory_space<vmem>>, vector<1x128xf32>
    %cst = arith.constant 5.000000e-01 : f32
    %6 = vector.broadcast %cst : f32 to vector<1x128xf32>
    %7 = arith.cmpf ogt, %5, %6 : vector<1x128xf32>
    %c0_8 = arith.constant 0 : index
    %c0_9 = arith.constant 0 : index
    %8 = vector.load %arg2[%c0_8, %c0_9] : memref<128x128xbf16, #tpu.memory_space<vmem>>, vector<128x128xbf16>
    %9 = arith.truncf %0 : vector<64x128xf32> to vector<64x128xbf16>
    %10 = arith.extf %9 : vector<64x128xbf16> to vector<64x128xf32>
    %11 = arith.subf %0, %10 : vector<64x128xf32>
    %12 = arith.truncf %11 : vector<64x128xf32> to vector<64x128xbf16>
    %13 = arith.extf %12 : vector<64x128xbf16> to vector<64x128xf32>
    %14 = arith.subf %11, %13 : vector<64x128xf32>
    %15 = arith.truncf %14 : vector<64x128xf32> to vector<64x128xbf16>
    %cst_10 = arith.constant dense<0.000000e+00> : vector<64x128xf32>
    %16 = tpu.matmul %9, %8, %cst_10 {dimension_numbers = #tpu.dot_dimension_numbers<[1], [0], [0], [1], [0, 0, 1, 1], [], []>} : vector<64x128xbf16>, vector<128x128xbf16>, vector<64x128xf32> -> vector<64x128xf32>
    %cst_11 = arith.constant dense<0.000000e+00> : vector<64x128xf32>
    %17 = tpu.matmul %12, %8, %cst_11 {dimension_numbers = #tpu.dot_dimension_numbers<[1], [0], [0], [1], [0, 0, 1, 1], [], []>} : vector<64x128xbf16>, vector<128x128xbf16>, vector<64x128xf32> -> vector<64x128xf32>
    %18 = arith.addf %16, %17 : vector<64x128xf32>
    %cst_12 = arith.constant dense<0.000000e+00> : vector<64x128xf32>
    %19 = tpu.matmul %15, %8, %cst_12 {dimension_numbers = #tpu.dot_dimension_numbers<[1], [0], [0], [1], [0, 0, 1, 1], [], []>} : vector<64x128xbf16>, vector<128x128xbf16>, vector<64x128xf32> -> vector<64x128xf32>
    %20 = arith.addf %18, %19 : vector<64x128xf32>
    %21 = arith.subf %20, %0 : vector<64x128xf32>
    %22 = vector.broadcast %4 : vector<1x128xf32> to vector<64x128xf32>
    %23 = arith.mulf %22, %21 : vector<64x128xf32>
    %24 = arith.addf %20, %0 : vector<64x128xf32>
    %cst_13 = arith.constant 5.000000e-01 : f32
    %25 = vector.broadcast %cst_13 : f32 to vector<64x128xf32>
    %26 = arith.mulf %25, %24 : vector<64x128xf32>
    %27 = vector.broadcast %3 : vector<1x128xf32> to vector<64x128xf32>
    %28 = arith.mulf %1, %27 : vector<64x128xf32>
    %29 = vector.broadcast %2 : vector<1x128xf32> to vector<64x128xf32>
    %30 = arith.addf %28, %29 : vector<64x128xf32>
    %31 = arith.mulf %30, %23 : vector<64x128xf32>
    %32 = arith.addf %26, %31 : vector<64x128xf32>
    %33 = math.exp %30 : vector<64x128xf32>
    %34 = arith.mulf %33, %23 : vector<64x128xf32>
    %cst_14 = arith.constant 0.000000e+00 : f32
    %35 = vector.shape_cast %7 : vector<1x128xi1> to vector<1x128xi1>
    %36 = vector.broadcast %35 : vector<1x128xi1> to vector<64x128xi1>
    %37 = vector.broadcast %cst_14 : f32 to vector<64x128xf32>
    %38 = arith.select %36, %32, %37 : vector<64x128xi1>, vector<64x128xf32>
    %cst_15 = arith.constant 5.000000e-01 : f32
    %39 = vector.broadcast %cst_15 : f32 to vector<64x128xf32>
    %40 = arith.mulf %39, %34 : vector<64x128xf32>
    %cst_16 = arith.constant 0.000000e+00 : f32
    %41 = vector.shape_cast %7 : vector<1x128xi1> to vector<1x128xi1>
    %42 = vector.broadcast %41 : vector<1x128xi1> to vector<64x128xi1>
    %43 = vector.broadcast %cst_16 : f32 to vector<64x128xf32>
    %44 = arith.select %42, %43, %40 : vector<64x128xi1>, vector<64x128xf32>
    %45 = arith.addf %38, %44 : vector<64x128xf32>
    %46 = arith.subf %38, %44 : vector<64x128xf32>
    %47 = arith.truncf %46 : vector<64x128xf32> to vector<64x128xbf16>
    %48 = arith.extf %47 : vector<64x128xbf16> to vector<64x128xf32>
    %49 = arith.subf %46, %48 : vector<64x128xf32>
    %50 = arith.truncf %49 : vector<64x128xf32> to vector<64x128xbf16>
    %51 = arith.extf %50 : vector<64x128xbf16> to vector<64x128xf32>
    %52 = arith.subf %49, %51 : vector<64x128xf32>
    %53 = arith.truncf %52 : vector<64x128xf32> to vector<64x128xbf16>
    %cst_17 = arith.constant dense<0.000000e+00> : vector<64x128xf32>
    %54 = tpu.matmul %47, %8, %cst_17 {dimension_numbers = #tpu.dot_dimension_numbers<[1], [0], [0], [1], [0, 0, 1, 1], [], []>} : vector<64x128xbf16>, vector<128x128xbf16>, vector<64x128xf32> -> vector<64x128xf32>
    %cst_18 = arith.constant dense<0.000000e+00> : vector<64x128xf32>
    %55 = tpu.matmul %50, %8, %cst_18 {dimension_numbers = #tpu.dot_dimension_numbers<[1], [0], [0], [1], [0, 0, 1, 1], [], []>} : vector<64x128xbf16>, vector<128x128xbf16>, vector<64x128xf32> -> vector<64x128xf32>
    %56 = arith.addf %54, %55 : vector<64x128xf32>
    %cst_19 = arith.constant dense<0.000000e+00> : vector<64x128xf32>
    %57 = tpu.matmul %53, %8, %cst_19 {dimension_numbers = #tpu.dot_dimension_numbers<[1], [0], [0], [1], [0, 0, 1, 1], [], []>} : vector<64x128xbf16>, vector<128x128xbf16>, vector<64x128xf32> -> vector<64x128xf32>
    %58 = arith.addf %56, %57 : vector<64x128xf32>
    %59 = arith.addf %45, %58 : vector<64x128xf32>
    %c0_20 = arith.constant 0 : index
    %c0_21 = arith.constant 0 : index
    %60 = vector.load %arg5[%c0_20, %c0_21] : memref<64x128xf32, #tpu.memory_space<vmem>>, vector<64x128xf32>
    tpu.vector_store %arg5[%c0_20, %c0_21], %59 {strides = array<i32>} : memref<64x128xf32, #tpu.memory_space<vmem>>, vector<64x128xf32>,
    return
  }
  func.func @transform_0(%arg0: i32) -> (i32, i32) {
    %c0_i32 = arith.constant 0 : i32
    %c0_i32_0 = arith.constant 0 : i32
    %c0_i32_1 = arith.constant 0 : i32
    return %c0_i32, %c0_i32_0 : i32, i32
  }
  func.func @transform_1(%arg0: i32) -> (i32, i32) {
    %c0_i32 = arith.constant 0 : i32
    %c0_i32_0 = arith.constant 0 : i32
    %c0_i32_1 = arith.constant 0 : i32
    return %c0_i32, %c0_i32_0 : i32, i32
  }
  func.func @transform_2(%arg0: i32) -> (i32, i32) {
    %c0_i32 = arith.constant 0 : i32
    %c0_i32_0 = arith.constant 0 : i32
    return %arg0, %c0_i32 : i32, i32
  }
  func.func @transform_3(%arg0: i32) -> (i32, i32) {
    %c0_i32 = arith.constant 0 : i32
    %c0_i32_0 = arith.constant 0 : i32
    return %arg0, %c0_i32 : i32, i32
  }
  func.func @transform_4(%arg0: i32) -> (i32, i32) {
    %c0_i32 = arith.constant 0 : i32
    %c0_i32_0 = arith.constant 0 : i32
    return %arg0, %c0_i32 : i32, i32
  }
}

</mosaic_0001>

<llo_original>
// kernel: tile.16
$region0: #{tile.16}
  #allocation0 [shape = 's32[1]{0}', space=sflag, size = 0x4, scoped, tag = 'scoped memory for tile.16']
  %s0 = inlined_call_operand.vmem [shape: f32[4], index: 0, kind: input, shape index: {}]
  %s1 = inlined_call_operand.vmem [shape: f32[32,4], index: 1, kind: output, shape index: {}]
  // Predicated region
  $region2: #{tile.16} parent=0 // pred_check
    _
  $region3: #{tile.16} parent=0 // pred_check_branch
    %3 = sbr.rel (0) target = $region5
  $region4: #{tile.16} parent=0 // pred_region
    _
  $region5: #{tile.16} parent=0 // pred_fallthru
    _
  %v4 = vld [vmem:[%s0] ss:$0 sm:$0xff]
  %5 = vst [vmem:[%s1] sm:$0xff] %v4
  %s6 = scalar_lea.vmem %s1, 8
  %7 = vst [vmem:[%s6] sm:$0xff] %v4
  %s8 = scalar_lea.vmem %s1, 16
  %9 = vst [vmem:[%s8] sm:$0xff] %v4
  %s10 = scalar_lea.vmem %s1, 24
  %11 = vst [vmem:[%s10] sm:$0xff] %v4

// kernel: tile.23
$region0: #{tile.23}
  %s0 = inlined_call_operand.vmem [shape: f32[32,4], index: 0, kind: input, shape index: {}]
  %s1 = inlined_call_operand.vmem [shape: f32[1,128], index: 1, kind: output, shape index: {}]
  $region1: #{tile.23} parent=0
    #allocation0 [shape = 'u8[4096]{0}', space=vmem, size = 0x1000, scoped, tag = 'scoped mem for output reshape']
    %v2 = vld [vmem:[%s0] sm:$0x1]
    %vm3 = vcmask 31744
    %4 = vst.msk [vmem:[#allocation0] sm:$0x1] %vm3, %v2
    %s5 = scalar_lea.vmem %s0, 31
    %v6 = vld [vmem:[%s5] sm:$0x1]
    %7 = vrot.lane.b32.xlu0 %v6, 124
    %v8 = vpop.permute.xlu0 %7
    %vm9 = vcmask 1048544
    %10 = vst.msk [vmem:[#allocation0] sm:$0x1] %vm9, %v8
    %s11 = scalar_lea.vmem %s0, 30
    %v12 = vld [vmem:[%s11] sm:$0x1]
    %13 = vrot.lane.b32.xlu0 %v12, 120
    %v14 = vpop.permute.xlu0 %13
    %vm15 = vcmask 1015744
    %16 = vst.msk [vmem:[#allocation0] sm:$0x1] %vm15, %v14
    %s17 = scalar_lea.vmem %s0, 29
    %v18 = vld [vmem:[%s17] sm:$0x1]
    %19 = vrot.lane.b32.xlu0 %v18, 116
    %v20 = vpop.permute.xlu0 %19
    %vm21 = vcmask 982944
    %22 = vst.msk [vmem:[#allocation0] sm:$0x1] %vm21, %v20
    %s23 = scalar_lea.vmem %s0, 28
    %v24 = vld [vmem:[%s23] sm:$0x1]
    %25 = vrot.lane.b32.xlu0 %v24, 112
    %v26 = vpop.permute.xlu0 %25
    %vm27 = vcmask 950144
    %28 = vst.msk [vmem:[#allocation0] sm:$0x1] %vm27, %v26
    %s29 = scalar_lea.vmem %s0, 27
    %v30 = vld [vmem:[%s29] sm:$0x1]
    %31 = vrot.lane.b32.xlu0 %v30, 108
    %v32 = vpop.permute.xlu0 %31
    %vm33 = vcmask 917344
    %34 = vst.msk [vmem:[#allocation0] sm:$0x1] %vm33, %v32
    %s35 = scalar_lea.vmem %s0, 26
    %v36 = vld [vmem:[%s35] sm:$0x1]
    %37 = vrot.lane.b32.xlu0 %v36, 104
    %v38 = vpop.permute.xlu0 %37
    %vm39 = vcmask 884544
    %40 = vst.msk [vmem:[#allocation0] sm:$0x1] %vm39, %v38
    %s41 = scalar_lea.vmem %s0, 25
    %v42 = vld [vmem:[%s41] sm:$0x1]
    %43 = vrot.lane.b32.xlu0 %v42, 100
    %v44 = vpop.permute.xlu0 %43
    %vm45 = vcmask 851744
    %46 = vst.msk [vmem:[#allocation0] sm:$0x1] %vm45, %v44
    %s47 = scalar_lea.vmem %s0, 24
    %v48 = vld [vmem:[%s47] sm:$0x1]
    %49 = vrot.lane.b32.xlu0 %v48, 96
    %v50 = vpop.permute.xlu0 %49
    %vm51 = vcmask 818944
    %52 = vst.msk [vmem:[#allocation0] sm:$0x1] %vm51, %v50
    %s53 = scalar_lea.vmem %s0, 23
    %v54 = vld [vmem:[%s53] sm:$0x1]
    %55 = vrot.lane.b32.xlu0 %v54, 92
    %v56 = vpop.permute.xlu0 %55
    %vm57 = vcmask 786144
    %58 = vst.msk [vmem:[#allocation0] sm:$0x1] %vm57, %v56
    %s59 = scalar_lea.vmem %s0, 22
    %v60 = vld [vmem:[%s59] sm:$0x1]
    %61 = vrot.lane.b32.xlu0 %v60, 88
    %v62 = vpop.permute.xlu0 %61
    %vm63 = vcmask 753344
    %64 = vst.msk [vmem:[#allocation0] sm:$0x1] %vm63, %v62
    %s65 = scalar_lea.vmem %s0, 21
    %v66 = vld [vmem:[%s65] sm:$0x1]
    %67 = vrot.lane.b32.xlu0 %v66, 84
    %v68 = vpop.permute.xlu0 %67
    %vm69 = vcmask 720544
    %70 = vst.msk [vmem:[#allocation0] sm:$0x1] %vm69, %v68
    %s71 = scalar_lea.vmem %s0, 20
    %v72 = vld [vmem:[%s71] sm:$0x1]
    %73 = vrot.lane.b32.xlu0 %v72, 80
    %v74 = vpop.permute.xlu0 %73
    %vm75 = vcmask 687744
    %76 = vst.msk [vmem:[#allocation0] sm:$0x1] %vm75, %v74
    %s77 = scalar_lea.vmem %s0, 19
    %v78 = vld [vmem:[%s77] sm:$0x1]
    %79 = vrot.lane.b32.xlu0 %v78, 76
    %v80 = vpop.permute.xlu0 %79
    %vm81 = vcmask 654944
    %82 = vst.msk [vmem:[#allocation0] sm:$0x1] %vm81, %v80
    %s83 = scalar_lea.vmem %s0, 18
    %v84 = vld [vmem:[%s83] sm:$0x1]
    %85 = vrot.lane.b32.xlu0 %v84, 72
    %v86 = vpop.permute.xlu0 %85
    %vm87 = vcmask 622144
    %88 = vst.msk [vmem:[#allocation0] sm:$0x1] %vm87, %v86
    %s89 = scalar_lea.vmem %s0, 17
    %v90 = vld [vmem:[%s89] sm:$0x1]
    %91 = vrot.lane.b32.xlu0 %v90, 68
    %v92 = vpop.permute.xlu0 %91
    %vm93 = vcmask 589344
    %94 = vst.msk [vmem:[#allocation0] sm:$0x1] %vm93, %v92
    %s95 = scalar_lea.vmem %s0, 16
    %v96 = vld [vmem:[%s95] sm:$0x1]
    %97 = vrot.lane.b32.xlu0 %v96, 64
    %v98 = vpop.permute.xlu0 %97
    %vm99 = vcmask 556544
    %100 = vst.msk [vmem:[#allocation0] sm:$0x1] %vm99, %v98
    %s101 = scalar_lea.vmem %s0, 15
    %v102 = vld [vmem:[%s101] sm:$0x1]
    %103 = vrot.lane.b32.xlu0 %v102, 60
    %v104 = vpop.permute.xlu0 %103
    %vm105 = vcmask 523744
    %106 = vst.msk [vmem:[#allocation0] sm:$0x1] %vm105, %v104
    %s107 = scalar_lea.vmem %s0, 14
    %v108 = vld [vmem:[%s107] sm:$0x1]
    %109 = vrot.lane.b32.xlu0 %v108, 56
    %v110 = vpop.permute.xlu0 %109
    %vm111 = vcmask 490944
    %112 = vst.msk [vmem:[#allocation0] sm:$0x1] %vm111, %v110
    %s113 = scalar_lea.vmem %s0, 13
    %v114 = vld [vmem:[%s113] sm:$0x1]
    %115 = vrot.lane.b32.xlu0 %v114, 52
    %v116 = vpop.permute.xlu0 %115
    %vm117 = vcmask 458144
    %118 = vst.msk [vmem:[#allocation0] sm:$0x1] %vm117, %v116
    %s119 = scalar_lea.vmem %s0, 12
    %v120 = vld [vmem:[%s119] sm:$0x1]
    %121 = vrot.lane.b32.xlu0 %v120, 48
    %v122 = vpop.permute.xlu0 %121
    %vm123 = vcmask 425344
    %124 = vst.msk [vmem:[#allocation0] sm:$0x1] %vm123, %v122
    %s125 = scalar_lea.vmem %s0, 11
    %v126 = vld [vmem:[%s125] sm:$0x1]
    %127 = vrot.lane.b32.xlu0 %v126, 44
    %v128 = vpop.permute.xlu0 %127
    %vm129 = vcmask 392544
    %130 = vst.msk [vmem:[#allocation0] sm:$0x1] %vm129, %v128
    %s131 = scalar_lea.vmem %s0, 10
    %v132 = vld [vmem:[%s131] sm:$0x1]
    %133 = vrot.lane.b32.xlu0 %v132, 40
    %v134 = vpop.permute.xlu0 %133
    %vm135 = vcmask 359744
    %136 = vst.msk [vmem:[#allocation0] sm:$0x1] %vm135, %v134
    %s137 = scalar_lea.vmem %s0, 9
    %v138 = vld [vmem:[%s137] sm:$0x1]
    %139 = vrot.lane.b32.xlu0 %v138, 36
    %v140 = vpop.permute.xlu0 %139
    %vm141 = vcmask 326944
    %142 = vst.msk [vmem:[#allocation0] sm:$0x1] %vm141, %v140
    %s143 = scalar_lea.vmem %s0, 8
    %v144 = vld [vmem:[%s143] sm:$0x1]
    %145 = vrot.lane.b32.xlu0 %v144, 32
    %v146 = vpop.permute.xlu0 %145
    %vm147 = vcmask 294144
    %148 = vst.msk [vmem:[#allocation0] sm:$0x1] %vm147, %v146
    %s149 = scalar_lea.vmem %s0, 7
    %v150 = vld [vmem:[%s149] sm:$0x1]
    %151 = vrot.lane.b32.xlu0 %v150, 28
    %v152 = vpop.permute.xlu0 %151
    %vm153 = vcmask 261344
    %154 = vst.msk [vmem:[#allocation0] sm:$0x1] %vm153, %v152
    %s155 = scalar_lea.vmem %s0, 6
    %v156 = vld [vmem:[%s155] sm:$0x1]
    %157 = vrot.lane.b32.xlu0 %v156, 24
    %v158 = vpop.permute.xlu0 %157
    %vm159 = vcmask 228544
    %160 = vst.msk [vmem:[#allocation0] sm:$0x1] %vm159, %v158
    %s161 = scalar_lea.vmem %s0, 5
    %v162 = vld [vmem:[%s161] sm:$0x1]
    %163 = vrot.lane.b32.xlu0 %v162, 20
    %v164 = vpop.permute.xlu0 %163
    %vm165 = vcmask 195744
    %166 = vst.msk [vmem:[#allocation0] sm:$0x1] %vm165, %v164
    %s167 = scalar_lea.vmem %s0, 4
    %v168 = vld [vmem:[%s167] sm:$0x1]
    %169 = vrot.lane.b32.xlu0 %v168, 16
    %v170 = vpop.permute.xlu0 %169
    %vm171 = vcmask 162944
    %172 = vst.msk [vmem:[#allocation0] sm:$0x1] %vm171, %v170
    %s173 = scalar_lea.vmem %s0, 3
    %v174 = vld [vmem:[%s173] sm:$0x1]
    %175 = vrot.lane.b32.xlu0 %v174, 12
    %v176 = vpop.permute.xlu0 %175
    %vm177 = vcmask 130144
    %178 = vst.msk [vmem:[#allocation0] sm:$0x1] %vm177, %v176
    %s179 = scalar_lea.vmem %s0, 2
    %v180 = vld [vmem:[%s179] sm:$0x1]
    %181 = vrot.lane.b32.xlu0 %v180, 8
    %v182 = vpop.permute.xlu0 %181
    %vm183 = vcmask 97344
    %184 = vst.msk [vmem:[#allocation0] sm:$0x1] %vm183, %v182
    %s185 = scalar_lea.vmem %s0, 1
    %v186 = vld [vmem:[%s185] sm:$0x1]
    %187 = vrot.lane.b32.xlu0 %v186, 4
    %v188 = vpop.permute.xlu0 %187
    %vm189 = vcmask 64544
    %190 = vst.msk [vmem:[#allocation0] sm:$0x1] %vm189, %v188
    %s192 = ssub.s32 2, 1
    %v193 = vld [vmem:[#allocation0] sm:%s192]
    %s195 = ssub.s32 2, 1
    %196 = vst [vmem:[%s1] sm:%s195] %v193

// kernel: _lambda_.1
$region0: #{_lambda_.1}
  #allocation0 [shape = 'u32[]', space=smem, size = 0x4, offset = 0x4, fixed_abs, tag = 'smem constant byte address 0x4 - core index']
  #allocation1 [shape = 'u32[72,128]{1,0:T(1,128)}', space=vmem, size = 0x9000, scoped, tag = 'internal scratch']
  %s0 = inlined_call_operand.vmem [shape: f32[4,128], index: 0, kind: input, shape index: {}]
  %s1 = inlined_call_operand.vmem [shape: bf16[128,128], index: 1, kind: input, shape index: {}]
  %s2 = inlined_call_operand.vmem [shape: f32[256,128], index: 2, kind: input, shape index: {}]
  %s3 = inlined_call_operand.vmem [shape: f32[256,128], index: 3, kind: input, shape index: {}]
  %s4 = inlined_call_operand.vmem [shape: f32[256,128], index: 4, kind: output, shape index: {}]
  %s5 = sld [smem:[#allocation0]]
  $region49: #{_lambda_.1} parent=0
    _
  %s7 = ssub.s32 1, %s5
  %s8 = scalar_select 0, %s7, %s5
  loop: start=0, step=1, limit=6
  $region2: #{_lambda_.1} parent=0 // loop_pre_header
    _
  $region3: #{_lambda_.1} parent=0 // loop_header
    %s10 = sphi 0, %s14
    %p11 = scmp.ge.s32.totalorder %s10, 6
    %s18 = sphi 0, %s18
    %s20 = sphi 0, %s18
    %s21 = sphi 0, %s20
    %s35 = sphi 0, %s21
    %s39 = sphi 0, %s39
    %s41 = sphi 0, %s39
    %s42 = sphi 0, %s41
    %s56 = sphi 0, %s42
    %s62 = sphi 0, %s64
    %s65 = sphi 0, %s62
    %s66 = sphi 0, %s65
    %s82 = sphi 0, %s66
    %s88 = sphi 0, %s90
    %s91 = sphi 0, %s88
    %s92 = sphi 0, %s91
    %s108 = sphi 0, %s92
    %s114 = sphi 0, %s116
    %s117 = sphi 0, %s114
    %s118 = sphi 0, %s117
    %s134 = sphi 0, %s118
  $region4: #{_lambda_.1} parent=0 // loop_header_branch
    %13 = sbr.rel (%p11) target = $region8
  $region5: #{_lambda_.1} parent=0 // loop_body
    %s15 = ssub.s32 %s10, 1
    %s16 = ssub.s32 %s10, 2
    %s17 = sadd.s32 %s10, 1
    %s19 = sadd.s32 %s18, 1
    %p22 = scmp.eq.s32.totalorder %s10, 3
    %p23 = scmp.ne.s32.totalorder %s18, %s20
    %p24 = scmp.eq.s32.totalorder %s10, 0
    %p25 = por %p23, %p24
    %p26 = scmp.ne.s32.totalorder %s18, %s20
    %p27 = scmp.eq.s32.totalorder %s15, 3
    %p28 = por %p26, %p27
    %p29 = scmp.ne.s32.totalorder %s20, %s21
    %p30 = scmp.eq.s32.totalorder %s15, 0
    %p31 = por %p29, %p30
    %p32 = scmp.ne.s32.totalorder %s20, %s21
    %p33 = scmp.eq.s32.totalorder %s16, 3
    %p34 = por %p32, %p33
    %p36 = scmp.ne.s32.totalorder %s21, %s35
    %p37 = scmp.eq.s32.totalorder %s16, 0
    %p38 = por %p36, %p37
    %s40 = sadd.s32 %s39, 1
    %p43 = scmp.eq.s32.totalorder %s10, 3
    %p44 = scmp.ne.s32.totalorder %s39, %s41
    %p45 = scmp.eq.s32.totalorder %s10, 0
    %p46 = por %p44, %p45
    %p47 = scmp.ne.s32.totalorder %s39, %s41
    %p48 = scmp.eq.s32.totalorder %s15, 3
    %p49 = por %p47, %p48
    %p50 = scmp.ne.s32.totalorder %s41, %s42
    %p51 = scmp.eq.s32.totalorder %s15, 0
    %p52 = por %p50, %p51
    %p53 = scmp.ne.s32.totalorder %s41, %s42
    %p54 = scmp.eq.s32.totalorder %s16, 3
    %p55 = por %p53, %p54
    %p57 = scmp.ne.s32.totalorder %s42, %s56
    %p58 = scmp.eq.s32.totalorder %s16, 0
    %p59 = por %p57, %p58
    %s60 = ssub.s32 %s10, %s17
    %p61 = scmp.eq.s32.totalorder %s60, 0
    %s63 = sadd.s32 %s62, 1
    %s64 = scalar_select %p61, %s62, %s63
    %p67 = pneg %p61
    %p68 = scmp.eq.s32.totalorder %s10, 3
    %p69 = por %p67, %p68
    %p70 = scmp.ne.s32.totalorder %s62, %s65
    %p71 = scmp.eq.s32.totalorder %s10, 0
    %p72 = por %p70, %p71
    %p73 = scmp.ne.s32.totalorder %s62, %s65
    %p74 = scmp.eq.s32.totalorder %s15, 3
    %p75 = por %p73, %p74
    %p76 = scmp.ne.s32.totalorder %s65, %s66
    %p77 = scmp.eq.s32.totalorder %s15, 0
    %p78 = por %p76, %p77
    %p79 = scmp.ne.s32.totalorder %s65, %s66
    %p80 = scmp.eq.s32.totalorder %s16, 3
    %p81 = por %p79, %p80
    %p83 = scmp.ne.s32.totalorder %s66, %s82
    %p84 = scmp.eq.s32.totalorder %s16, 0
    %p85 = por %p83, %p84
    %s86 = ssub.s32 %s10, %s17
    %p87 = scmp.eq.s32.totalorder %s86, 0
    %s89 = sadd.s32 %s88, 1
    %s90 = scalar_select %p87, %s88, %s89
    %p93 = pneg %p87
    %p94 = scmp.eq.s32.totalorder %s10, 3
    %p95 = por %p93, %p94
    %p96 = scmp.ne.s32.totalorder %s88, %s91
    %p97 = scmp.eq.s32.totalorder %s10, 0
    %p98 = por %p96, %p97
    %p99 = scmp.ne.s32.totalorder %s88, %s91
    %p100 = scmp.eq.s32.totalorder %s15, 3
    %p101 = por %p99, %p100
    %p102 = scmp.ne.s32.totalorder %s91, %s92
    %p103 = scmp.eq.s32.totalorder %s15, 0
    %p104 = por %p102, %p103
    %p105 = scmp.ne.s32.totalorder %s91, %s92
    %p106 = scmp.eq.s32.totalorder %s16, 3
    %p107 = por %p105, %p106
    %p109 = scmp.ne.s32.totalorder %s92, %s108
    %p110 = scmp.eq.s32.totalorder %s16, 0
    %p111 = por %p109, %p110
    %s112 = ssub.s32 %s10, %s17
    %p113 = scmp.eq.s32.totalorder %s112, 0
    %s115 = sadd.s32 %s114, 1
    %s116 = scalar_select %p113, %s114, %s115
    %p119 = pneg %p113
    %p120 = scmp.eq.s32.totalorder %s10, 3
    %p121 = por %p119, %p120
    %p122 = scmp.ne.s32.totalorder %s114, %s117
    %p123 = scmp.eq.s32.totalorder %s10, 0
    %p124 = por %p122, %p123
    %p125 = scmp.ne.s32.totalorder %s114, %s117
    %p126 = scmp.eq.s32.totalorder %s15, 3
    %p127 = por %p125, %p126
    %p128 = scmp.ne.s32.totalorder %s117, %s118
    %p129 = scmp.eq.s32.totalorder %s15, 0
    %p130 = por %p128, %p129
    %p131 = scmp.ne.s32.totalorder %s117, %s118
    %p132 = scmp.eq.s32.totalorder %s16, 3
    %p133 = por %p131, %p132
    %p135 = scmp.ne.s32.totalorder %s118, %s134
    %p136 = scmp.eq.s32.totalorder %s16, 0
    %p137 = por %p135, %p136
    %p138 = scmp.le.s32.totalorder 1, %s10
    %p139 = scmp.lt.s32.totalorder %s10, 5
    %p140 = pnand %p138, %p139
    %p141 = pneg %p140
    // Predicated region
    $region9: #{_lambda_.1} parent=5 // pred_check
      _
    $region10: #{_lambda_.1} parent=5 // pred_check_branch
      %143 = sbr.rel (%p140) target = $region12
    $region11: #{_lambda_.1} parent=5 // pred_region
      %s144 = ssub.s32 %s10, 1
      // Predicated region
      $region13: #{_lambda_.1} parent=11 // pred_check
        %p145 = pneg %p31
      $region14: #{_lambda_.1} parent=11 // pred_check_branch
        %147 = sbr.rel (%p145) target = $region16
      $region15: #{_lambda_.1} parent=11 // pred_region
        _
      $region16: #{_lambda_.1} parent=11 // pred_fallthru
        _
      // Predicated region
      $region17: #{_lambda_.1} parent=11 // pred_check
        %p148 = pneg %p52
      $region18: #{_lambda_.1} parent=11 // pred_check_branch
        %150 = sbr.rel (%p148) target = $region20
      $region19: #{_lambda_.1} parent=11 // pred_region
        _
      $region20: #{_lambda_.1} parent=11 // pred_fallthru
        _
    $region12: #{_lambda_.1} parent=5 // pred_fallthru
      _
    %p151 = scmp.lt.s32.totalorder %s10, 4
    // Predicated region
    $region21: #{_lambda_.1} parent=5 // pred_check
      %p152 = pneg %p151
    $region22: #{_lambda_.1} parent=5 // pred_check_branch
      %154 = sbr.rel (%p152) target = $region24
    $region23: #{_lambda_.1} parent=5 // pred_region
      // Predicated region
      $region25: #{_lambda_.1} parent=23 // pred_check
        %p155 = pneg %p72
      $region26: #{_lambda_.1} parent=23 // pred_check_branch
        %157 = sbr.rel (%p155) target = $region28
      $region27: #{_lambda_.1} parent=23 // pred_region
        %s158 = smul.u32 8, %s10
        %p159 = scmp.lt.s32.totalorder %s158, 31
        %s160 = scalar_select %p159, %s158, 31
        %s161 = smul.addr %s160, 8
        %s162 = scalar_lea.vmem %s2, %s161
        %s163 = smul.u32 8, %s10
      $region28: #{_lambda_.1} parent=23 // pred_fallthru
        _
      // Predicated region
      $region29: #{_lambda_.1} parent=23 // pred_check
        %p164 = pneg %p98
      $region30: #{_lambda_.1} parent=23 // pred_check_branch
        %166 = sbr.rel (%p164) target = $region32
      $region31: #{_lambda_.1} parent=23 // pred_region
        %s167 = smul.u32 8, %s10
        %p168 = scmp.lt.s32.totalorder %s167, 31
        %s169 = scalar_select %p168, %s167, 31
        %s170 = smul.addr %s169, 8
        %s171 = scalar_lea.vmem %s3, %s170
        %s172 = smul.u32 8, %s10
      $region32: #{_lambda_.1} parent=23 // pred_fallthru
        _
    $region24: #{_lambda_.1} parent=5 // pred_fallthru
      _
    %p173 = scmp.le.s32.totalorder 1, %s10
    %p174 = scmp.lt.s32.totalorder %s10, 5
    %p175 = pnand %p173, %p174
    %p176 = pneg %p175
    // Predicated region
    $region33: #{_lambda_.1} parent=5 // pred_check
      _
    $region34: #{_lambda_.1} parent=5 // pred_check_branch
      %178 = sbr.rel (%p175) target = $region36
    $region35: #{_lambda_.1} parent=5 // pred_region
      %s179 = ssub.s32 %s10, 1
      %p180 = pneg %p31
      %p181 = pneg %p28
      %p182 = pneg %p52
      %p183 = pneg %p49
      %s184 = smul.u32 8, %s15
      %p185 = scmp.lt.s32.totalorder %s184, 31
      %s186 = scalar_select %p185, %s184, 31
      %s187 = smul.addr %s186, 8
      %s188 = scalar_lea.vmem %s2, %s187
      %p189 = pneg %p78
      %p190 = pneg %p75
      %s191 = smul.u32 8, %s15
      %p192 = scmp.lt.s32.totalorder %s191, 31
      %s193 = scalar_select %p192, %s191, 31
      %s194 = smul.addr %s193, 8
      %s195 = scalar_lea.vmem %s3, %s194
      %p196 = pneg %p104
      %p197 = pneg %p101
      %p198 = pneg %p130
      %p199 = pneg %p127
      %s200 = smul.u32 8, %s15
      %p201 = scmp.lt.s32.totalorder %s200, 31
      %s202 = scalar_select %p201, %s200, 31
      %s203 = smul.addr %s202, 8
      %s204 = scalar_lea.vmem %s4, %s203
      %s205 = smul.u32 8, %s15
      %p206 = scmp.lt.s32.totalorder %s205, 31
      %s207 = scalar_select %p206, %s205, 31
      %s208 = smul.addr %s207, 8
      %s209 = scalar_lea.vmem %s2, %s208
      %s210 = smul.u32 8, %s15
      %s211 = smul.u32 8, %s15
      %p212 = scmp.lt.s32.totalorder %s211, 31
      %s213 = scalar_select %p212, %s211, 31
      %s214 = smul.addr %s213, 8
      %s215 = scalar_lea.vmem %s3, %s214
      %s216 = smul.u32 8, %s15
      %s217 = smul.u32 8, %s15
      %p218 = scmp.lt.s32.totalorder %s217, 31
      %s219 = scalar_select %p218, %s217, 31
      %s220 = smul.addr %s219, 8
      %s221 = scalar_lea.vmem %s4, %s220
      %s222 = smul.u32 8, %s15
      %v223 = vld [vmem:[%s209] sm:$0xff]
      %v224 = vld [vmem:[%s209 + $0x8] sm:$0xff]
      %v225 = vld [vmem:[%s209 + $0x10] sm:$0xff]
      %v226 = vld [vmem:[%s209 + $0x18] sm:$0xff]
      %v227 = vld [vmem:[%s209 + $0x20] sm:$0xff]
      %v228 = vld [vmem:[%s209 + $0x28] sm:$0xff]
      %v229 = vld [vmem:[%s209 + $0x30] sm:$0xff]
      %v230 = vld [vmem:[%s209 + $0x38] sm:$0xff]
      %v231 = vld [vmem:[%s215] sm:$0xff]
      %v232 = vld [vmem:[%s215 + $0x8] sm:$0xff]
      %v233 = vld [vmem:[%s215 + $0x10] sm:$0xff]
      %v234 = vld [vmem:[%s215 + $0x18] sm:$0xff]
      %v235 = vld [vmem:[%s215 + $0x20] sm:$0xff]
      %v236 = vld [vmem:[%s215 + $0x28] sm:$0xff]
      %v237 = vld [vmem:[%s215 + $0x30] sm:$0xff]
      %v238 = vld [vmem:[%s215 + $0x38] sm:$0xff]
      %v239 = vld [vmem:[%s0] sm:$0x1]
      %v240 = vld [vmem:[%s0 + $0x1] sm:$0x1]
      %v241 = vld [vmem:[%s0 + $0x2] sm:$0x1]
      %v242 = vld [vmem:[%s0 + $0x3] sm:$0x1]
      %vm243 = vcmp.gt.f32.partialorder %v242, 0.5
      %v244 = vld [vmem:[%s1] sm:$0xf]
      %v245 = vld [vmem:[%s1 + $0x4] sm:$0xf]
      %v246 = vld [vmem:[%s1 + $0x8] sm:$0xf]
      %v247 = vld [vmem:[%s1 + $0xc] sm:$0xf]
      %v248 = vld [vmem:[%s1 + $0x10] sm:$0xf]
      %v249 = vld [vmem:[%s1 + $0x14] sm:$0xf]
      %v250 = vld [vmem:[%s1 + $0x18] sm:$0xf]
      %v251 = vld [vmem:[%s1 + $0x1c] sm:$0xf]
      %v252 = vld [vmem:[%s1 + $0x20] sm:$0xf]
      %v253 = vld [vmem:[%s1 + $0x24] sm:$0xf]
      %v254 = vld [vmem:[%s1 + $0x28] sm:$0xf]
      %v255 = vld [vmem:[%s1 + $0x2c] sm:$0xf]
      %v256 = vld [vmem:[%s1 + $0x30] sm:$0xf]
      %v257 = vld [vmem:[%s1 + $0x34] sm:$0xf]
      %v258 = vld [vmem:[%s1 + $0x38] sm:$0xf]
      %v259 = vld [vmem:[%s1 + $0x3c] sm:$0xf]
      %v260 = vpack.c.bf16 %v223, %v223
      %v261 = vpack.c.bf16 %v224, %v224
      %v262 = vpack.c.bf16 %v225, %v225
      %v263 = vpack.c.bf16 %v226, %v226
      %v264 = vpack.c.bf16 %v227, %v227
      %v265 = vpack.c.bf16 %v228, %v228
      %v266 = vpack.c.bf16 %v229, %v229
      %v267 = vpack.c.bf16 %v230, %v230
      %v268 = vunpack.c.l.bf16 %v260
      %v269 = vunpack.c.l.bf16 %v261
      %v270 = vunpack.c.l.bf16 %v262
      %v271 = vunpack.c.l.bf16 %v263
      %v272 = vunpack.c.l.bf16 %v264
      %v273 = vunpack.c.l.bf16 %v265
      %v274 = vunpack.c.l.bf16 %v266
      %v275 = vunpack.c.l.bf16 %v267
      %v276 = vsub.f32 %v223, %v268
      %v277 = vsub.f32 %v224, %v269
      %v278 = vsub.f32 %v225, %v270
      %v279 = vsub.f32 %v226, %v271
      %v280 = vsub.f32 %v227, %v272
      %v281 = vsub.f32 %v228, %v273
      %v282 = vsub.f32 %v229, %v274
      %v283 = vsub.f32 %v230, %v275
      %v284 = vpack.c.bf16 %v276, %v276
      %v285 = vpack.c.bf16 %v277, %v277
      %v286 = vpack.c.bf16 %v278, %v278
      %v287 = vpack.c.bf16 %v279, %v279
      %v288 = vpack.c.bf16 %v280, %v280
      %v289 = vpack.c.bf16 %v281, %v281
      %v290 = vpack.c.bf16 %v282, %v282
      %v291 = vpack.c.bf16 %v283, %v283
      %v292 = vunpack.c.l.bf16 %v284
      %v293 = vunpack.c.l.bf16 %v285
      %v294 = vunpack.c.l.bf16 %v286
      %v295 = vunpack.c.l.bf16 %v287
      %v296 = vunpack.c.l.bf16 %v288
      %v297 = vunpack.c.l.bf16 %v289
      %v298 = vunpack.c.l.bf16 %v290
      %v299 = vunpack.c.l.bf16 %v291
      %v300 = vsub.f32 %v276, %v292
      %v301 = vsub.f32 %v277, %v293
      %v302 = vsub.f32 %v278, %v294
      %v303 = vsub.f32 %v279, %v295
      %v304 = vsub.f32 %v280, %v296
      %v305 = vsub.f32 %v281, %v297
      %v306 = vsub.f32 %v282, %v298
      %v307 = vsub.f32 %v283, %v299
      %v308 = vpack.c.bf16 %v301, %v300
      %v309 = vpack.c.bf16 %v303, %v302
      %v310 = vpack.c.bf16 %v305, %v304
      %v311 = vpack.c.bf16 %v307, %v306
      %v320 = vunpack.c.l.b16 %v284
      %v321 = vunpack.c.l.b16 %v285
      %v322 = vunpack.c.l.b16 %v286
      %v323 = vunpack.c.l.b16 %v287
      %v324 = vunpack.c.l.b16 %v288
      %v325 = vunpack.c.l.b16 %v289
      %v326 = vunpack.c.l.b16 %v290
      %v327 = vunpack.c.l.b16 %v291
      %v328 = vpack.c.b16 %v321, %v320
      %v329 = vpack.c.b16 %v323, %v322
      %v330 = vpack.c.b16 %v325, %v324
      %v331 = vpack.c.b16 %v327, %v326
      %v352 = vunpack.c.l.b16 %v244
      %v353 = vunpack.c.l.b16 %v245
      %v354 = vunpack.c.l.b16 %v246
      %v355 = vunpack.c.l.b16 %v247
      %v356 = vunpack.c.l.b16 %v248
      %v357 = vunpack.c.l.b16 %v249
      %v358 = vunpack.c.l.b16 %v250
      %v359 = vunpack.c.l.b16 %v251
      %v360 = vunpack.c.l.b16 %v252
      %v361 = vunpack.c.l.b16 %v253
      %v362 = vunpack.c.l.b16 %v254
      %v363 = vunpack.c.l.b16 %v255
      %v364 = vunpack.c.l.b16 %v256
      %v365 = vunpack.c.l.b16 %v257
      %v366 = vunpack.c.l.b16 %v258
      %v367 = vunpack.c.l.b16 %v259
      %v368 = vpack.c.b16 %v353, %v352
      %v369 = vpack.c.b16 %v355, %v354
      %v370 = vpack.c.b16 %v357, %v356
      %v371 = vpack.c.b16 %v359, %v358
      %v372 = vpack.c.b16 %v361, %v360
      %v373 = vpack.c.b16 %v363, %v362
      %v374 = vpack.c.b16 %v365, %v364
      %v375 = vpack.c.b16 %v367, %v366
      %384 = vmatpush.bf16.msra.mxu0 %v375
      %385 = vmatpush.bf16.msra.mxu0 %v374
      %386 = vmatpush.bf16.msra.mxu0 %v373
      %387 = vmatpush.bf16.msra.mxu0 %v372
      %388 = vmatpush.bf16.msra.mxu0 %v371
      %389 = vmatpush.bf16.msra.mxu0 %v370
      %390 = vmatpush.bf16.msra.mxu0 %v369
      %391 = vmatpush.bf16.msra.mxu0 %v368
      %392 = vmatmul.bf16.gmra.mxu0 %v328
      %v393 = vpop.f32.mrf.mxu0
      %v394 = vadd.f32 0.0, %v393
      %v395 = vpop.f32.mrf.mxu0
      %v396 = vadd.f32 0.0, %v395
      %397 = vmatmul.bf16.gmra.mxu0 %v329
      %v398 = vpop.f32.mrf.mxu0
      %v399 = vadd.f32 0.0, %v398
      %v400 = vpop.f32.mrf.mxu0
      %v401 = vadd.f32 0.0, %v400
      %402 = vmatmul.bf16.gmra.mxu0 %v330
      %v403 = vpop.f32.mrf.mxu0
      %v404 = vadd.f32 0.0, %v403
      %v405 = vpop.f32.mrf.mxu0
      %v406 = vadd.f32 0.0, %v405
      %407 = vmatmul.bf16.gmra.mxu0 %v331
      %v408 = vpop.f32.mrf.mxu0
      %v409 = vadd.f32 0.0, %v408
      %v410 = vpop.f32.mrf.mxu0
      %v411 = vadd.f32 0.0, %v410
      %412 = vdwg.mxu0
      %v421 = vunpack.c.l.b16 %v260
      %v422 = vunpack.c.l.b16 %v261
      %v423 = vunpack.c.l.b16 %v262
      %v424 = vunpack.c.l.b16 %v263
      %v425 = vunpack.c.l.b16 %v264
      %v426 = vunpack.c.l.b16 %v265
      %v427 = vunpack.c.l.b16 %v266
      %v428 = vunpack.c.l.b16 %v267
      %v429 = vpack.c.b16 %v422, %v421
      %v430 = vpack.c.b16 %v424, %v423
      %v431 = vpack.c.b16 %v426, %v425
      %v432 = vpack.c.b16 %v428, %v427
      %437 = vmatpush.bf16.msra.mxu0 %v375
      %438 = vmatpush.bf16.msra.mxu0 %v374
      %439 = vmatpush.bf16.msra.mxu0 %v373
      %440 = vmatpush.bf16.msra.mxu0 %v372
      %441 = vmatpush.bf16.msra.mxu0 %v371
      %442 = vmatpush.bf16.msra.mxu0 %v370
      %443 = vmatpush.bf16.msra.mxu0 %v369
      %444 = vmatpush.bf16.msra.mxu0 %v368
      %445 = vmatmul.bf16.gmra.mxu0 %v429
      %v446 = vpop.f32.mrf.mxu0
      %v447 = vadd.f32 %v394, %v446
      %v448 = vpop.f32.mrf.mxu0
      %v449 = vadd.f32 %v396, %v448
      %450 = vmatmul.bf16.gmra.mxu0 %v430
      %v451 = vpop.f32.mrf.mxu0
      %v452 = vadd.f32 %v399, %v451
      %v453 = vpop.f32.mrf.mxu0
      %v454 = vadd.f32 %v401, %v453
      %455 = vmatmul.bf16.gmra.mxu0 %v431
      %v456 = vpop.f32.mrf.mxu0
      %v457 = vadd.f32 %v404, %v456
      %v458 = vpop.f32.mrf.mxu0
      %v459 = vadd.f32 %v406, %v458
      %460 = vmatmul.bf16.gmra.mxu0 %v432
      %v461 = vpop.f32.mrf.mxu0
      %v462 = vadd.f32 %v409, %v461
      %v463 = vpop.f32.mrf.mxu0
      %v464 = vadd.f32 %v411, %v463
      %465 = vdwg.mxu0
      %466 = vmatpush.bf16.msra.mxu0 %v375
      %467 = vmatpush.bf16.msra.mxu0 %v374
      %468 = vmatpush.bf16.msra.mxu0 %v373
      %469 = vmatpush.bf16.msra.mxu0 %v372
      %470 = vmatpush.bf16.msra.mxu0 %v371
      %471 = vmatpush.bf16.msra.mxu0 %v370
      %472 = vmatpush.bf16.msra.mxu0 %v369
      %473 = vmatpush.bf16.msra.mxu0 %v368
      %474 = vmatmul.bf16.gmra.mxu0 %v308
      %v475 = vpop.f32.mrf.mxu0
      %v476 = vadd.f32 0.0, %v475
      %v477 = vpop.f32.mrf.mxu0
      %v478 = vadd.f32 0.0, %v477
      %479 = vmatmul.bf16.gmra.mxu0 %v309
      %v480 = vpop.f32.mrf.mxu0
      %v481 = vadd.f32 0.0, %v480
      %v482 = vpop.f32.mrf.mxu0
      %v483 = vadd.f32 0.0, %v482
      %484 = vmatmul.bf16.gmra.mxu0 %v310
      %v485 = vpop.f32.mrf.mxu0
      %v486 = vadd.f32 0.0, %v485
      %v487 = vpop.f32.mrf.mxu0
      %v488 = vadd.f32 0.0, %v487
      %489 = vmatmul.bf16.gmra.mxu0 %v311
      %v490 = vpop.f32.mrf.mxu0
      %v491 = vadd.f32 0.0, %v490
      %v492 = vpop.f32.mrf.mxu0
      %v493 = vadd.f32 0.0, %v492
      %494 = vdwg.mxu0
      %v495 = vadd.f32 %v447, %v476
      %v496 = vadd.f32 %v449, %v478
      %v497 = vadd.f32 %v452, %v481
      %v498 = vadd.f32 %v454, %v483
      %v499 = vadd.f32 %v457, %v486
      %v500 = vadd.f32 %v459, %v488
      %v501 = vadd.f32 %v462, %v491
      %v502 = vadd.f32 %v464, %v493
      %v503 = vsub.f32 %v495, %v223
      %v504 = vsub.f32 %v496, %v224
      %v505 = vsub.f32 %v497, %v225
      %v506 = vsub.f32 %v498, %v226
      %v507 = vsub.f32 %v499, %v227
      %v508 = vsub.f32 %v500, %v228
      %v509 = vsub.f32 %v501, %v229
      %v510 = vsub.f32 %v502, %v230
      %v511 = vperm.slane %v241, 0
      %v512 = vmul.f32 %v511, %v503
      %v513 = vmul.f32 %v511, %v504
      %v514 = vmul.f32 %v511, %v505
      %v515 = vmul.f32 %v511, %v506
      %v516 = vmul.f32 %v511, %v507
      %v517 = vmul.f32 %v511, %v508
      %v518 = vmul.f32 %v511, %v509
      %v519 = vmul.f32 %v511, %v510
      %v520 = vadd.f32 %v495, %v223
      %v521 = vadd.f32 %v496, %v224
      %v522 = vadd.f32 %v497, %v225
      %v523 = vadd.f32 %v498, %v226
      %v524 = vadd.f32 %v499, %v227
      %v525 = vadd.f32 %v500, %v228
      %v526 = vadd.f32 %v501, %v229
      %v527 = vadd.f32 %v502, %v230
      %v528 = vmul.f32 %v520, 0.5
      %v529 = vmul.f32 %v521, 0.5
      %v530 = vmul.f32 %v522, 0.5
      %v531 = vmul.f32 %v523, 0.5
      %v532 = vmul.f32 %v524, 0.5
      %v533 = vmul.f32 %v525, 0.5
      %v534 = vmul.f32 %v526, 0.5
      %v535 = vmul.f32 %v527, 0.5
      %v536 = vperm.slane %v240, 0
      %v537 = vmul.f32 %v231, %v536
      %v538 = vmul.f32 %v232, %v536
      %v539 = vmul.f32 %v233, %v536
      %v540 = vmul.f32 %v234, %v536
      %v541 = vmul.f32 %v235, %v536
      %v542 = vmul.f32 %v236, %v536
      %v543 = vmul.f32 %v237, %v536
      %v544 = vmul.f32 %v238, %v536
      %v545 = vperm.slane %v239, 0
      %v546 = vadd.f32 %v537, %v545
      %v547 = vadd.f32 %v538, %v545
      %v548 = vadd.f32 %v539, %v545
      %v549 = vadd.f32 %v540, %v545
      %v550 = vadd.f32 %v541, %v545
      %v551 = vadd.f32 %v542, %v545
      %v552 = vadd.f32 %v543, %v545
      %v553 = vadd.f32 %v544, %v545
      %v554 = vmul.f32 %v546, %v512
      %v555 = vmul.f32 %v547, %v513
      %v556 = vmul.f32 %v548, %v514
      %v557 = vmul.f32 %v549, %v515
      %v558 = vmul.f32 %v550, %v516
      %v559 = vmul.f32 %v551, %v517
      %v560 = vmul.f32 %v552, %v518
      %v561 = vmul.f32 %v553, %v519
      %v562 = vadd.f32 %v528, %v554
      %v563 = vadd.f32 %v529, %v555
      %v564 = vadd.f32 %v530, %v556
      %v565 = vadd.f32 %v531, %v557
      %v566 = vadd.f32 %v532, %v558
      %v567 = vadd.f32 %v533, %v559
      %v568 = vadd.f32 %v534, %v560
      %v569 = vadd.f32 %v535, %v561
      %v570 = vmul.f32 %v546, 1.442695
      %v571 = vpow.pop %v570
      %v572 = vmul.f32 %v547, 1.442695
      %v573 = vpow.pop %v572
      %v574 = vmul.f32 %v548, 1.442695
      %v575 = vpow.pop %v574
      %v576 = vmul.f32 %v549, 1.442695
      %v577 = vpow.pop %v576
      %v578 = vmul.f32 %v550, 1.442695
      %v579 = vpow.pop %v578
      %v580 = vmul.f32 %v551, 1.442695
      %v581 = vpow.pop %v580
      %v582 = vmul.f32 %v552, 1.442695
      %v583 = vpow.pop %v582
      %v584 = vmul.f32 %v553, 1.442695
      %v585 = vpow.pop %v584
      %v586 = vmul.f32 %v571, %v512
      %v587 = vmul.f32 %v573, %v513
      %v588 = vmul.f32 %v575, %v514
      %v589 = vmul.f32 %v577, %v515
      %v590 = vmul.f32 %v579, %v516
      %v591 = vmul.f32 %v581, %v517
      %v592 = vmul.f32 %v583, %v518
      %v593 = vmul.f32 %v585, %v519
      %v594 = vsel %vm243, 1, 0
      %v595 = vperm.slane %v594, 0
      %vm596 = vcmp.eq.s32.totalorder %v595, 1
      %v597 = vsel %vm596, %v562, 0.0
      %v598 = vsel %vm596, %v563, 0.0
      %v599 = vsel %vm596, %v564, 0.0
      %v600 = vsel %vm596, %v565, 0.0
      %v601 = vsel %vm596, %v566, 0.0
      %v602 = vsel %vm596, %v567, 0.0
      %v603 = vsel %vm596, %v568, 0.0
      %v604 = vsel %vm596, %v569, 0.0
      %v605 = vmul.f32 %v586, 0.5
      %v606 = vmul.f32 %v587, 0.5
      %v607 = vmul.f32 %v588, 0.5
      %v608 = vmul.f32 %v589, 0.5
      %v609 = vmul.f32 %v590, 0.5
      %v610 = vmul.f32 %v591, 0.5
      %v611 = vmul.f32 %v592, 0.5
      %v612 = vmul.f32 %v593, 0.5
      %v613 = vsel %vm596, 0.0, %v605
      %v614 = vsel %vm596, 0.0, %v606
      %v615 = vsel %vm596, 0.0, %v607
      %v616 = vsel %vm596, 0.0, %v608
      %v617 = vsel %vm596, 0.0, %v609
      %v618 = vsel %vm596, 0.0, %v610
      %v619 = vsel %vm596, 0.0, %v611
      %v620 = vsel %vm596, 0.0, %v612
      %v621 = vadd.f32 %v597, %v613
      %v622 = vadd.f32 %v598, %v614
      %v623 = vadd.f32 %v599, %v615
      %v624 = vadd.f32 %v600, %v616
      %v625 = vadd.f32 %v601, %v617
      %v626 = vadd.f32 %v602, %v618
      %v627 = vadd.f32 %v603, %v619
      %v628 = vadd.f32 %v604, %v620
      %v629 = vsub.f32 %v597, %v613
      %v630 = vsub.f32 %v598, %v614
      %v631 = vsub.f32 %v599, %v615
      %v632 = vsub.f32 %v600, %v616
      %v633 = vsub.f32 %v601, %v617
      %v634 = vsub.f32 %v602, %v618
      %v635 = vsub.f32 %v603, %v619
      %v636 = vsub.f32 %v604, %v620
      %v637 = vpack.c.bf16 %v629, %v629
      %v638 = vpack.c.bf16 %v630, %v630
      %v639 = vpack.c.bf16 %v631, %v631
      %v640 = vpack.c.bf16 %v632, %v632
      %v641 = vpack.c.bf16 %v633, %v633
      %v642 = vpack.c.bf16 %v634, %v634
      %v643 = vpack.c.bf16 %v635, %v635
      %v644 = vpack.c.bf16 %v636, %v636
      %v645 = vunpack.c.l.bf16 %v637
      %v646 = vunpack.c.l.bf16 %v638
      %v647 = vunpack.c.l.bf16 %v639
      %v648 = vunpack.c.l.bf16 %v640
      %v649 = vunpack.c.l.bf16 %v641
      %v650 = vunpack.c.l.bf16 %v642
      %v651 = vunpack.c.l.bf16 %v643
      %v652 = vunpack.c.l.bf16 %v644
      %v653 = vsub.f32 %v629, %v645
      %v654 = vsub.f32 %v630, %v646
      %v655 = vsub.f32 %v631, %v647
      %v656 = vsub.f32 %v632, %v648
      %v657 = vsub.f32 %v633, %v649
      %v658 = vsub.f32 %v634, %v650
      %v659 = vsub.f32 %v635, %v651
      %v660 = vsub.f32 %v636, %v652
      %v661 = vpack.c.bf16 %v653, %v653
      %v662 = vpack.c.bf16 %v654, %v654
      %v663 = vpack.c.bf16 %v655, %v655
      %v664 = vpack.c.bf16 %v656, %v656
      %v665 = vpack.c.bf16 %v657, %v657
      %v666 = vpack.c.bf16 %v658, %v658
      %v667 = vpack.c.bf16 %v659, %v659
      %v668 = vpack.c.bf16 %v660, %v660
      %v669 = vunpack.c.l.bf16 %v661
      %v670 = vunpack.c.l.bf16 %v662
      %v671 = vunpack.c.l.bf16 %v663
      %v672 = vunpack.c.l.bf16 %v664
      %v673 = vunpack.c.l.bf16 %v665
      %v674 = vunpack.c.l.bf16 %v666
      %v675 = vunpack.c.l.bf16 %v667
      %v676 = vunpack.c.l.bf16 %v668
      %v677 = vsub.f32 %v653, %v669
      %v678 = vsub.f32 %v654, %v670
      %v679 = vsub.f32 %v655, %v671
      %v680 = vsub.f32 %v656, %v672
      %v681 = vsub.f32 %v657, %v673
      %v682 = vsub.f32 %v658, %v674
      %v683 = vsub.f32 %v659, %v675
      %v684 = vsub.f32 %v660, %v676
      %v685 = vpack.c.bf16 %v678, %v677
      %v686 = vpack.c.bf16 %v680, %v679
      %v687 = vpack.c.bf16 %v682, %v681
      %v688 = vpack.c.bf16 %v684, %v683
      %v697 = vunpack.c.l.b16 %v661
      %v698 = vunpack.c.l.b16 %v662
      %v699 = vunpack.c.l.b16 %v663
      %v700 = vunpack.c.l.b16 %v664
      %v701 = vunpack.c.l.b16 %v665
      %v702 = vunpack.c.l.b16 %v666
      %v703 = vunpack.c.l.b16 %v667
      %v704 = vunpack.c.l.b16 %v668
      %v705 = vpack.c.b16 %v698, %v697
      %v706 = vpack.c.b16 %v700, %v699
      %v707 = vpack.c.b16 %v702, %v701
      %v708 = vpack.c.b16 %v704, %v703
      %713 = vmatpush.bf16.msra.mxu0 %v375
      %714 = vmatpush.bf16.msra.mxu0 %v374
      %715 = vmatpush.bf16.msra.mxu0 %v373
      %716 = vmatpush.bf16.msra.mxu0 %v372
      %717 = vmatpush.bf16.msra.mxu0 %v371
      %718 = vmatpush.bf16.msra.mxu0 %v370
      %719 = vmatpush.bf16.msra.mxu0 %v369
      %720 = vmatpush.bf16.msra.mxu0 %v368
      %721 = vmatmul.bf16.gmra.mxu0 %v705
      %v722 = vpop.f32.mrf.mxu0
      %v723 = vadd.f32 0.0, %v722
      %v724 = vpop.f32.mrf.mxu0
      %v725 = vadd.f32 0.0, %v724
      %726 = vmatmul.bf16.gmra.mxu0 %v706
      %v727 = vpop.f32.mrf.mxu0
      %v728 = vadd.f32 0.0, %v727
      %v729 = vpop.f32.mrf.mxu0
      %v730 = vadd.f32 0.0, %v729
      %731 = vmatmul.bf16.gmra.mxu0 %v707
      %v732 = vpop.f32.mrf.mxu0
      %v733 = vadd.f32 0.0, %v732
      %v734 = vpop.f32.mrf.mxu0
      %v735 = vadd.f32 0.0, %v734
      %736 = vmatmul.bf16.gmra.mxu0 %v708
      %v737 = vpop.f32.mrf.mxu0
      %v738 = vadd.f32 0.0, %v737
      %v739 = vpop.f32.mrf.mxu0
      %v740 = vadd.f32 0.0, %v739
      %741 = vdwg.mxu0
      %v750 = vunpack.c.l.b16 %v637
      %v751 = vunpack.c.l.b16 %v638
      %v752 = vunpack.c.l.b16 %v639
      %v753 = vunpack.c.l.b16 %v640
      %v754 = vunpack.c.l.b16 %v641
      %v755 = vunpack.c.l.b16 %v642
      %v756 = vunpack.c.l.b16 %v643
      %v757 = vunpack.c.l.b16 %v644
      %v758 = vpack.c.b16 %v751, %v750
      %v759 = vpack.c.b16 %v753, %v752
      %v760 = vpack.c.b16 %v755, %v754
      %v761 = vpack.c.b16 %v757, %v756
      %766 = vmatpush.bf16.msra.mxu0 %v375
      %767 = vmatpush.bf16.msra.mxu0 %v374
      %768 = vmatpush.bf16.msra.mxu0 %v373
      %769 = vmatpush.bf16.msra.mxu0 %v372
      %770 = vmatpush.bf16.msra.mxu0 %v371
      %771 = vmatpush.bf16.msra.mxu0 %v370
      %772 = vmatpush.bf16.msra.mxu0 %v369
      %773 = vmatpush.bf16.msra.mxu0 %v368
      %774 = vmatmul.bf16.gmra.mxu0 %v758
      %v775 = vpop.f32.mrf.mxu0
      %v776 = vadd.f32 %v723, %v775
      %v777 = vpop.f32.mrf.mxu0
      %v778 = vadd.f32 %v725, %v777
      %779 = vmatmul.bf16.gmra.mxu0 %v759
      %v780 = vpop.f32.mrf.mxu0
      %v781 = vadd.f32 %v728, %v780
      %v782 = vpop.f32.mrf.mxu0
      %v783 = vadd.f32 %v730, %v782
      %784 = vmatmul.bf16.gmra.mxu0 %v760
      %v785 = vpop.f32.mrf.mxu0
      %v786 = vadd.f32 %v733, %v785
      %v787 = vpop.f32.mrf.mxu0
      %v788 = vadd.f32 %v735, %v787
      %789 = vmatmul.bf16.gmra.mxu0 %v761
      %v790 = vpop.f32.mrf.mxu0
      %v791 = vadd.f32 %v738, %v790
      %v792 = vpop.f32.mrf.mxu0
      %v793 = vadd.f32 %v740, %v792
      %794 = vdwg.mxu0
      %795 = vmatpush.bf16.msra.mxu0 %v375
      %796 = vmatpush.bf16.msra.mxu0 %v374
      %797 = vmatpush.bf16.msra.mxu0 %v373
      %798 = vmatpush.bf16.msra.mxu0 %v372
      %799 = vmatpush.bf16.msra.mxu0 %v371
      %800 = vmatpush.bf16.msra.mxu0 %v370
      %801 = vmatpush.bf16.msra.mxu0 %v369
      %802 = vmatpush.bf16.msra.mxu0 %v368
      %803 = vmatmul.bf16.gmra.mxu0 %v685
      %v804 = vpop.f32.mrf.mxu0
      %v805 = vadd.f32 0.0, %v804
      %v806 = vpop.f32.mrf.mxu0
      %v807 = vadd.f32 0.0, %v806
      %808 = vmatmul.bf16.gmra.mxu0 %v686
      %v809 = vpop.f32.mrf.mxu0
      %v810 = vadd.f32 0.0, %v809
      %v811 = vpop.f32.mrf.mxu0
      %v812 = vadd.f32 0.0, %v811
      %813 = vmatmul.bf16.gmra.mxu0 %v687
      %v814 = vpop.f32.mrf.mxu0
      %v815 = vadd.f32 0.0, %v814
      %v816 = vpop.f32.mrf.mxu0
      %v817 = vadd.f32 0.0, %v816
      %818 = vmatmul.bf16.gmra.mxu0 %v688
      %v819 = vpop.f32.mrf.mxu0
      %v820 = vadd.f32 0.0, %v819
      %v821 = vpop.f32.mrf.mxu0
      %v822 = vadd.f32 0.0, %v821
      %823 = vdwg.mxu0
      %v824 = vadd.f32 %v776, %v805
      %v825 = vadd.f32 %v778, %v807
      %v826 = vadd.f32 %v781, %v810
      %v827 = vadd.f32 %v783, %v812
      %v828 = vadd.f32 %v786, %v815
      %v829 = vadd.f32 %v788, %v817
      %v830 = vadd.f32 %v791, %v820
      %v831 = vadd.f32 %v793, %v822
      %v832 = vadd.f32 %v621, %v824
      %v833 = vadd.f32 %v622, %v825
      %v834 = vadd.f32 %v623, %v826
      %v835 = vadd.f32 %v624, %v827
      %v836 = vadd.f32 %v625, %v828
      %v837 = vadd.f32 %v626, %v829
      %v838 = vadd.f32 %v627, %v830
      %v839 = vadd.f32 %v628, %v831
      %840 = vst [vmem:[%s221] sm:$0xff] %v832
      %841 = vst [vmem:[%s221 + $0x8] sm:$0xff] %v833
      %842 = vst [vmem:[%s221 + $0x10] sm:$0xff] %v834
      %843 = vst [vmem:[%s221 + $0x18] sm:$0xff] %v835
      %844 = vst [vmem:[%s221 + $0x20] sm:$0xff] %v836
      %845 = vst [vmem:[%s221 + $0x28] sm:$0xff] %v837
      %846 = vst [vmem:[%s221 + $0x30] sm:$0xff] %v838
      %847 = vst [vmem:[%s221 + $0x38] sm:$0xff] %v839
      %s848 = smul.u32 8, %s15
      %p849 = scmp.lt.s32.totalorder %s848, 31
      %s850 = scalar_select %p849, %s848, 31
      %s851 = smul.addr %s850, 8
      %s852 = scalar_lea.vmem %s4, %s851
      // Predicated region
      $region37: #{_lambda_.1} parent=35 // pred_check
        %p853 = pneg %p127
      $region38: #{_lambda_.1} parent=35 // pred_check_branch
        %855 = sbr.rel (%p853) target = $region40
      $region39: #{_lambda_.1} parent=35 // pred_region
        %s856 = smul.u32 8, %s15
      $region40: #{_lambda_.1} parent=35 // pred_fallthru
        _
    $region36: #{_lambda_.1} parent=5 // pred_fallthru
      _
    %p857 = scmp.le.s32.totalorder 2, %s10
    // Predicated region
    $region41: #{_lambda_.1} parent=5 // pred_check
      %p858 = pneg %p857
    $region42: #{_lambda_.1} parent=5 // pred_check_branch
      %860 = sbr.rel (%p858) target = $region44
    $region43: #{_lambda_.1} parent=5 // pred_region
      %s861 = ssub.s32 %s10, 2
      // Predicated region
      $region45: #{_lambda_.1} parent=43 // pred_check
        %p862 = pneg %p133
      $region46: #{_lambda_.1} parent=43 // pred_check_branch
        %864 = sbr.rel (%p862) target = $region48
      $region47: #{_lambda_.1} parent=43 // pred_region
        %s865 = smul.u32 8, %s16
        %p866 = scmp.lt.s32.totalorder %s865, 31
        %s867 = scalar_select %p866, %s865, 31
        %s868 = smul.addr %s867, 8
        %s869 = scalar_lea.vmem %s4, %s868
      $region48: #{_lambda_.1} parent=43 // pred_fallthru
        _
    $region44: #{_lambda_.1} parent=5 // pred_fallthru
      _
  $region6: #{_lambda_.1} parent=0 // loop_footer
    %s14 = sadd.s32 1, %s10
  $region7: #{_lambda_.1} parent=0 // loop_footer_branch
    %9 = sbr.rel target = $region3
  $region8: #{_lambda_.1} parent=0 // loop_exit
    _

</llo_original>
